<compile_context>
chip_gen: v7x
topology: tpu7x:2x2x1
jax: 0.10.0
libtpu: 0.0.40
codegen_flags: <defaults>
</compile_context>

<pallas_src>
import jax
import jax.numpy as jnp
from jax.experimental import pallas as pl
from jax.experimental.pallas import tpu as pltpu


# Per-block VMEM budget: Pallas double-buffers input and output, so roughly
# 4x this is live at once.  8 MiB/block -> ~32 MiB live, which fits v7x's
# 64 MiB VMEM with headroom and is far under v5e/v6e's 128 MiB.
_PER_BLOCK_BUDGET_BYTES = 8 * 1024 * 1024
# Raised scoped-VMEM limit (defaults are 16 MiB on v5e / 32 MiB on v6e & v7x).
_VMEM_LIMIT_BYTES = 48 * 1024 * 1024


def _n2d2_perm_to_torch_perm(perm):
    """Convert an N2D2 (W,H,C,N)-order perm to a PyTorch (N,C,H,W)-order perm."""
    return tuple(3 - perm[3 - i] for i in range(4))


def _pick_block_batch(nc, slice_bytes, budget_bytes, min_steps=2):
    """Largest divisor of `nc` whose slab fits the VMEM budget while keeping at
    least `min_steps` grid steps (so both v7x TensorCores get work)."""
    min_steps = min(min_steps, nc)
    best = 1
    for d in range(1, nc + 1):
        if nc % d == 0 and nc // d >= min_steps and d * slice_bytes <= budget_bytes:
            best = d
    return best


def _transpose_hw_kernel(x_ref, o_ref):
    # x_ref: (BNC, H, W) slab.  A batched minor-dim swap lowers to an XLU
    # transpose; the (W, H) output block equals the full array extents, so the
    # BlockSpec (8,128) rule is satisfied for any H, W.
    o_ref[...] = jnp.transpose(x_ref[...], (0, 2, 1))


def n2d2_transpose(x, perm):
    """Applies the N2D2 Transpose cell (perm in N2D2 order) to an NCHW tensor."""
    if x.ndim != 4:
        raise ValueError(f"expected a 4-D NCHW tensor, got shape {x.shape}")

    torch_perm = _n2d2_perm_to_torch_perm(perm)

    # Explicit guard (was only a comment before): this kernel supports perms
    # that keep batch/channel in place and permute only the spatial dims.
    if tuple(torch_perm[:2]) != (0, 1) or set(torch_perm[2:]) != {2, 3}:
        raise NotImplementedError(
            "n2d2_transpose (Pallas) only supports permutations that keep N/C "
            f"in place and permute the spatial dims; got torch perm {torch_perm}.")

    if tuple(torch_perm[2:]) == (2, 3):
        # Identity permutation: pure pass-through.
        return x

    n, c, h, w = x.shape
    nc = n * c

    # Fold N and C into one batch axis (contiguous reshape, free).
    x3 = x.reshape(nc, h, w)

    itemsize = jnp.dtype(x.dtype).itemsize
    slice_bytes = h * w * itemsize
    bnc = _pick_block_batch(nc, slice_bytes, _PER_BLOCK_BUDGET_BYTES)
    grid = (nc // bnc,)

    out3 = pl.pallas_call(
        _transpose_hw_kernel,
        out_shape=jax.ShapeDtypeStruct((nc, w, h), x.dtype),
        grid=grid,
        in_specs=[pl.BlockSpec((bnc, h, w), lambda g: (g, 0, 0))],
        out_specs=pl.BlockSpec((bnc, w, h), lambda g: (g, 0, 0)),
        compiler_params=pltpu.CompilerParams(
            dimension_semantics=("parallel",),
            vmem_limit_bytes=_VMEM_LIMIT_BYTES),
        # Bandwidth-only custom call: flops=0, bytes = read + write.
        cost_estimate=pl.CostEstimate(
            flops=0,
            transcendentals=0,
            bytes_accessed=2 * x.size * itemsize),
    )(x3)

    # Contiguous reshape back to the permuted NCHW layout (free).
    return out3.reshape(n, c, w, h)


if __name__ == "__main__":
    key = jax.random.PRNGKey(0)
    # small NCHW input: batch=2, channels=4, spatial=16x16
    x = jax.random.normal(key, (2, 4, 16, 16), dtype=jnp.float32)

    # N2D2 perm used by the pytorch interop test: swap X and Y (i.e. H <-> W).
    perm = [1, 0, 2, 3]

    out = n2d2_transpose(x, perm)
    out = jax.block_until_ready(out)

    # reference check in plain JAX
    torch_perm = _n2d2_perm_to_torch_perm(perm)   # -> (0, 1, 3, 2)
    ref = jnp.transpose(x, torch_perm)
    assert out.shape == ref.shape, (out.shape, ref.shape)
    assert jnp.array_equal(out, ref), "mismatch vs reference transpose"

    print("KERNEL_OK")
</pallas_src>

<mosaic_0001>
module attributes {stable_mosaic.version = 11 : i64} {
  func.func @_transpose_hw_kernel(%arg0: i32, %arg1: memref<4x16x16xf32, #tpu.memory_space<vmem>>, %arg2: memref<4x16x16xf32, #tpu.memory_space<vmem>>) attributes {dimension_semantics = [#tpu.dimension_semantics<parallel>], iteration_bounds = array<i64: 2>, scalar_prefetch = 0 : i64, scratch_operands = 0 : i64, tpu.core_type = #tpu.core_type<tc>, window_params = [{transform_indices = @transform_0, window_bounds = array<i64: 4, 16, 16>}, {transform_indices = @transform_1, window_bounds = array<i64: 4, 16, 16>}]} {
    %c0 = arith.constant 0 : index
    %c0_0 = arith.constant 0 : index
    %c0_1 = arith.constant 0 : index
    %0 = vector.load %arg1[%c0, %c0_0, %c0_1] : memref<4x16x16xf32, #tpu.memory_space<vmem>>, vector<4x16x16xf32>
    %1 = tpu.transpose %0, [0, 2, 1] : vector<4x16x16xf32> -> vector<4x16x16xf32>
    %c0_2 = arith.constant 0 : index
    %c0_3 = arith.constant 0 : index
    %c0_4 = arith.constant 0 : index
    %2 = vector.load %arg2[%c0_2, %c0_3, %c0_4] : memref<4x16x16xf32, #tpu.memory_space<vmem>>, vector<4x16x16xf32>
    tpu.vector_store %arg2[%c0_2, %c0_3, %c0_4], %1 {strides = array<i32>} : memref<4x16x16xf32, #tpu.memory_space<vmem>>, vector<4x16x16xf32>,
    return
  }
  func.func @transform_0(%arg0: i32) -> (i32, i32, i32) {
    %c0_i32 = arith.constant 0 : i32
    %c0_i32_0 = arith.constant 0 : i32
    %c0_i32_1 = arith.constant 0 : i32
    return %arg0, %c0_i32, %c0_i32_0 : i32, i32, i32
  }
  func.func @transform_1(%arg0: i32) -> (i32, i32, i32) {
    %c0_i32 = arith.constant 0 : i32
    %c0_i32_0 = arith.constant 0 : i32
    %c0_i32_1 = arith.constant 0 : i32
    return %arg0, %c0_i32, %c0_i32_0 : i32, i32, i32
  }
}

</mosaic_0001>

<llo_original>
// kernel: tpu_custom_call.1
$region0: #{tpu_custom_call.1}
  #allocation0 [shape = 'u32[]', space=smem, size = 0x4, offset = 0x4, fixed_abs, tag = 'smem constant byte address 0x4 - core index']
  #allocation1 [shape = 'u32[144,128]{1,0:T(1,128)}', space=vmem, size = 0x12000, scoped, tag = 'internal scratch']
  %s0 = inlined_call_operand.hbm [shape: f32[8,16,16], index: 0, kind: input, shape index: {}]
  %s1 = inlined_call_operand.hbm [shape: f32[8,16,16], index: 1, kind: output, shape index: {}]
  %s2 = sld [smem:[#allocation0]]
  $region41: #{tpu_custom_call.1} parent=0
    _
  %s4 = ssub.s32 1, %s2
  %s5 = scalar_select 0, %s4, %s2
  $region1: #{tpu_custom_call.1} parent=0
    #allocation2 [shape = 'u8[65536]{0}', space=vmem, size = 0x10000, scoped, tag = 'input window, operand 0']
    #allocation3 [shape = 's32[2]{0}', space=sflag, size = 0x8, scoped, tag = 'scoped memory for tpu_custom_call.1']
    #allocation4 [shape = 's32[2]{0}', space=sflag, size = 0x8, scoped, tag = 'scoped memory for tpu_custom_call.1']
    #allocation5 [shape = 'u8[65536]{0}', space=vmem, size = 0x10000, scoped, tag = 'output window, operand 0']
    %6 = vsyncpa [#allocation3], 0
    %s7 = scalar_lea.sflag [#allocation3], 1
    %8 = vsyncpa %s7, 0
    %9 = vsyncpa [#allocation4], 0
    %s10 = scalar_lea.sflag [#allocation4], 1
    %11 = vsyncpa %s10, 0
    loop: start=0, step=1, limit=4
    $region2: #{tpu_custom_call.1} parent=1 // loop_pre_header
      _
    $region3: #{tpu_custom_call.1} parent=1 // loop_header
      %s13 = sphi 0, %s17
      %p14 = scmp.ge.s32.totalorder %s13, 4
      %s23 = sphi 0, %s25
      %s26 = sphi 0, %s23
      %s27 = sphi 0, %s26
      %s43 = sphi 0, %s27
      %s49 = sphi 0, %s51
      %s52 = sphi 0, %s49
      %s53 = sphi 0, %s52
      %s69 = sphi 0, %s53
    $region4: #{tpu_custom_call.1} parent=1 // loop_header_branch
      %16 = sbr.rel (%p14) target = $region8
    $region5: #{tpu_custom_call.1} parent=1 // loop_body
      %s18 = ssub.s32 %s13, 1
      %s19 = ssub.s32 %s13, 2
      %s20 = sadd.s32 %s13, 1
      %s21 = ssub.s32 %s13, %s20
      %p22 = scmp.eq.s32.totalorder %s21, 0
      %s24 = sadd.s32 %s23, 1
      %s25 = scalar_select %p22, %s23, %s24
      %p28 = pneg %p22
      %p29 = scmp.eq.s32.totalorder %s13, 1
      %p30 = por %p28, %p29
      %p31 = scmp.ne.s32.totalorder %s23, %s26
      %p32 = scmp.eq.s32.totalorder %s13, 0
      %p33 = por %p31, %p32
      %p34 = scmp.ne.s32.totalorder %s23, %s26
      %p35 = scmp.eq.s32.totalorder %s18, 1
      %p36 = por %p34, %p35
      %p37 = scmp.ne.s32.totalorder %s26, %s27
      %p38 = scmp.eq.s32.totalorder %s18, 0
      %p39 = por %p37, %p38
      %p40 = scmp.ne.s32.totalorder %s26, %s27
      %p41 = scmp.eq.s32.totalorder %s19, 1
      %p42 = por %p40, %p41
      %p44 = scmp.ne.s32.totalorder %s27, %s43
      %p45 = scmp.eq.s32.totalorder %s19, 0
      %p46 = por %p44, %p45
      %s47 = ssub.s32 %s13, %s20
      %p48 = scmp.eq.s32.totalorder %s47, 0
      %s50 = sadd.s32 %s49, 1
      %s51 = scalar_select %p48, %s49, %s50
      %p54 = pneg %p48
      %p55 = scmp.eq.s32.totalorder %s13, 1
      %p56 = por %p54, %p55
      %p57 = scmp.ne.s32.totalorder %s49, %s52
      %p58 = scmp.eq.s32.totalorder %s13, 0
      %p59 = por %p57, %p58
      %p60 = scmp.ne.s32.totalorder %s49, %s52
      %p61 = scmp.eq.s32.totalorder %s18, 1
      %p62 = por %p60, %p61
      %p63 = scmp.ne.s32.totalorder %s52, %s53
      %p64 = scmp.eq.s32.totalorder %s18, 0
      %p65 = por %p63, %p64
      %p66 = scmp.ne.s32.totalorder %s52, %s53
      %p67 = scmp.eq.s32.totalorder %s19, 1
      %p68 = por %p66, %p67
      %p70 = scmp.ne.s32.totalorder %s53, %s69
      %p71 = scmp.eq.s32.totalorder %s19, 0
      %p72 = por %p70, %p71
      %p73 = scmp.le.s32.totalorder 1, %s13
      %p74 = scmp.lt.s32.totalorder %s13, 3
      %p75 = pnand %p73, %p74
      %p76 = pneg %p75
      // Predicated region
      $region9: #{tpu_custom_call.1} parent=5 // pred_check
        _
      $region10: #{tpu_custom_call.1} parent=5 // pred_check_branch
        %78 = sbr.rel (%p75) target = $region12
      $region11: #{tpu_custom_call.1} parent=5 // pred_region
        %s79 = ssub.s32 %s13, 1
      $region12: #{tpu_custom_call.1} parent=5 // pred_fallthru
        _
      %p80 = scmp.lt.s32.totalorder %s13, 2
      // Predicated region
      $region13: #{tpu_custom_call.1} parent=5 // pred_check
        %p81 = pneg %p80
      $region14: #{tpu_custom_call.1} parent=5 // pred_check_branch
        %83 = sbr.rel (%p81) target = $region16
      $region15: #{tpu_custom_call.1} parent=5 // pred_region
        // Predicated region
        $region17: #{tpu_custom_call.1} parent=15 // pred_check
          %p84 = pneg %p33
        $region18: #{tpu_custom_call.1} parent=15 // pred_check_branch
          %86 = sbr.rel (%p84) target = $region20
        $region19: #{tpu_custom_call.1} parent=15 // pred_region
          %s87 = sand.u32 %s23, 1
          %s88 = scalar_lea.sflag [#allocation3], %s87
          %s89 = sand.u32 %s23, 1
          %s90 = smul.addr %s89, 64
          %s91 = scalar_lea.vmem [#allocation2], %s90
          %s92 = smul.u32 4, %s13
          %s94 = ssub.s32 1024, 1024
          %95 = vsyncadd %s88, %s94
          %s96 = smul.addr %s92, 2
          %s97 = smul.addr %s96, 128
          %s98 = scalar_lea.hbm %s0, %s97
          %s99 = sshll.u32 %s91, 4
          %s100 = int_to_ptr.vmem [resolvable:$true] %s99
          %105 = dma.hbm_to_vmem [thread:$0]  %s98, 1024, %s100, %s88, 128, 128, 8
        $region20: #{tpu_custom_call.1} parent=15 // pred_fallthru
          _
      $region16: #{tpu_custom_call.1} parent=5 // pred_fallthru
        _
      %p106 = scmp.le.s32.totalorder 1, %s13
      %p107 = scmp.lt.s32.totalorder %s13, 3
      %p108 = pnand %p106, %p107
      %p109 = pneg %p108
      // Predicated region
      $region21: #{tpu_custom_call.1} parent=5 // pred_check
        _
      $region22: #{tpu_custom_call.1} parent=5 // pred_check_branch
        %111 = sbr.rel (%p108) target = $region24
      $region23: #{tpu_custom_call.1} parent=5 // pred_region
        %s112 = ssub.s32 %s13, 1
        %s113 = sand.u32 %s26, 1
        %s114 = scalar_lea.sflag [#allocation3], %s113
        %s115 = sand.u32 %s26, 1
        %s116 = smul.addr %s115, 64
        %s117 = scalar_lea.vmem [#allocation2], %s116
        // Predicated region
        $region25: #{tpu_custom_call.1} parent=23 // pred_check
          %p118 = pneg %p39
        $region26: #{tpu_custom_call.1} parent=23 // pred_check_branch
          %120 = sbr.rel (%p118) target = $region28
        $region27: #{tpu_custom_call.1} parent=23 // pred_region
          %121 = dma.done %s114, 1024
        $region28: #{tpu_custom_call.1} parent=23 // pred_fallthru
          _
        %s122 = sand.u32 %s26, 1
        %s123 = scalar_lea.sflag [#allocation3], %s122
        %s124 = sand.u32 %s26, 1
        %s125 = smul.addr %s124, 64
        %s126 = scalar_lea.vmem [#allocation2], %s125
        %p127 = pneg %p39
        %p128 = pneg %p36
        %p129 = pneg %p65
        %p130 = pneg %p62
        %s131 = sand.u32 %s52, 1
        %s132 = scalar_lea.sflag [#allocation4], %s131
        %s133 = sand.u32 %s52, 1
        %s134 = smul.addr %s133, 64
        %s135 = scalar_lea.vmem [#allocation5], %s134
        %s136 = smul.u32 4, %s18
        %s137 = smul.u32 4, %s18
        %v138 = vld [vmem:[%s117] sm:$0xff]
        %v139 = vld [vmem:[%s117 + $0x8] sm:$0xff]
        %v140 = vld [vmem:[%s117 + $0x10] sm:$0xff]
        %v141 = vld [vmem:[%s117 + $0x18] sm:$0xff]
        %v142 = vld [vmem:[%s117 + $0x20] sm:$0xff]
        %v143 = vld [vmem:[%s117 + $0x28] sm:$0xff]
        %v144 = vld [vmem:[%s117 + $0x30] sm:$0xff]
        %v145 = vld [vmem:[%s117 + $0x38] sm:$0xff]
        %146 = vxpose.xlu0.b32.start [1/16] %v138, 128
        %147 = vxpose.xlu0.b32.cont [2/16] %v139, 128
        %148 = vxpose.xlu0.b32.cont [3/16] 0.0, 128
        %149 = vxpose.xlu0.b32.cont [4/16] 0.0, 128
        %150 = vxpose.xlu0.b32.cont [5/16] 0.0, 128
        %151 = vxpose.xlu0.b32.cont [6/16] 0.0, 128
        %152 = vxpose.xlu0.b32.cont [7/16] 0.0, 128
        %153 = vxpose.xlu0.b32.cont [8/16] 0.0, 128
        %154 = vxpose.xlu0.b32.cont [9/16] 0.0, 128
        %155 = vxpose.xlu0.b32.cont [10/16] 0.0, 128
        %156 = vxpose.xlu0.b32.cont [11/16] 0.0, 128
        %157 = vxpose.xlu0.b32.cont [12/16] 0.0, 128
        %158 = vxpose.xlu0.b32.cont [13/16] 0.0, 128
        %159 = vxpose.xlu0.b32.cont [14/16] 0.0, 128
        %160 = vxpose.xlu0.b32.cont [15/16] 0.0, 128
        %161 = vxpose.xlu0.b32.end [16/16] 0.0, 128
        %v162 = vpop.trf.xlu0
        %v163 = vpop.trf.xlu0
        %v164 = vpop.trf.xlu0
        %v165 = vpop.trf.xlu0
        %v166 = vpop.trf.xlu0
        %v167 = vpop.trf.xlu0
        %v168 = vpop.trf.xlu0
        %v169 = vpop.trf.xlu0
        %v170 = vpop.trf.xlu0
        %v171 = vpop.trf.xlu0
        %v172 = vpop.trf.xlu0
        %v173 = vpop.trf.xlu0
        %v174 = vpop.trf.xlu0
        %v175 = vpop.trf.xlu0
        %v176 = vpop.trf.xlu0
        %v177 = vpop.trf.xlu0
        %178 = vxpose.xlu0.b32.start [1/16] %v140, 128
        %179 = vxpose.xlu0.b32.cont [2/16] %v141, 128
        %180 = vxpose.xlu0.b32.cont [3/16] 0.0, 128
        %181 = vxpose.xlu0.b32.cont [4/16] 0.0, 128
        %182 = vxpose.xlu0.b32.cont [5/16] 0.0, 128
        %183 = vxpose.xlu0.b32.cont [6/16] 0.0, 128
        %184 = vxpose.xlu0.b32.cont [7/16] 0.0, 128
        %185 = vxpose.xlu0.b32.cont [8/16] 0.0, 128
        %186 = vxpose.xlu0.b32.cont [9/16] 0.0, 128
        %187 = vxpose.xlu0.b32.cont [10/16] 0.0, 128
        %188 = vxpose.xlu0.b32.cont [11/16] 0.0, 128
        %189 = vxpose.xlu0.b32.cont [12/16] 0.0, 128
        %190 = vxpose.xlu0.b32.cont [13/16] 0.0, 128
        %191 = vxpose.xlu0.b32.cont [14/16] 0.0, 128
        %192 = vxpose.xlu0.b32.cont [15/16] 0.0, 128
        %193 = vxpose.xlu0.b32.end [16/16] 0.0, 128
        %v194 = vpop.trf.xlu0
        %v195 = vpop.trf.xlu0
        %v196 = vpop.trf.xlu0
        %v197 = vpop.trf.xlu0
        %v198 = vpop.trf.xlu0
        %v199 = vpop.trf.xlu0
        %v200 = vpop.trf.xlu0
        %v201 = vpop.trf.xlu0
        %v202 = vpop.trf.xlu0
        %v203 = vpop.trf.xlu0
        %v204 = vpop.trf.xlu0
        %v205 = vpop.trf.xlu0
        %v206 = vpop.trf.xlu0
        %v207 = vpop.trf.xlu0
        %v208 = vpop.trf.xlu0
        %v209 = vpop.trf.xlu0
        %210 = vxpose.xlu0.b32.start [1/16] %v142, 128
        %211 = vxpose.xlu0.b32.cont [2/16] %v143, 128
        %212 = vxpose.xlu0.b32.cont [3/16] 0.0, 128
        %213 = vxpose.xlu0.b32.cont [4/16] 0.0, 128
        %214 = vxpose.xlu0.b32.cont [5/16] 0.0, 128
        %215 = vxpose.xlu0.b32.cont [6/16] 0.0, 128
        %216 = vxpose.xlu0.b32.cont [7/16] 0.0, 128
        %217 = vxpose.xlu0.b32.cont [8/16] 0.0, 128
        %218 = vxpose.xlu0.b32.cont [9/16] 0.0, 128
        %219 = vxpose.xlu0.b32.cont [10/16] 0.0, 128
        %220 = vxpose.xlu0.b32.cont [11/16] 0.0, 128
        %221 = vxpose.xlu0.b32.cont [12/16] 0.0, 128
        %222 = vxpose.xlu0.b32.cont [13/16] 0.0, 128
        %223 = vxpose.xlu0.b32.cont [14/16] 0.0, 128
        %224 = vxpose.xlu0.b32.cont [15/16] 0.0, 128
        %225 = vxpose.xlu0.b32.end [16/16] 0.0, 128
        %v226 = vpop.trf.xlu0
        %v227 = vpop.trf.xlu0
        %v228 = vpop.trf.xlu0
        %v229 = vpop.trf.xlu0
        %v230 = vpop.trf.xlu0
        %v231 = vpop.trf.xlu0
        %v232 = vpop.trf.xlu0
        %v233 = vpop.trf.xlu0
        %v234 = vpop.trf.xlu0
        %v235 = vpop.trf.xlu0
        %v236 = vpop.trf.xlu0
        %v237 = vpop.trf.xlu0
        %v238 = vpop.trf.xlu0
        %v239 = vpop.trf.xlu0
        %v240 = vpop.trf.xlu0
        %v241 = vpop.trf.xlu0
        %242 = vxpose.xlu0.b32.start [1/16] %v144, 128
        %243 = vxpose.xlu0.b32.cont [2/16] %v145, 128
        %244 = vxpose.xlu0.b32.cont [3/16] 0.0, 128
        %245 = vxpose.xlu0.b32.cont [4/16] 0.0, 128
        %246 = vxpose.xlu0.b32.cont [5/16] 0.0, 128
        %247 = vxpose.xlu0.b32.cont [6/16] 0.0, 128
        %248 = vxpose.xlu0.b32.cont [7/16] 0.0, 128
        %249 = vxpose.xlu0.b32.cont [8/16] 0.0, 128
        %250 = vxpose.xlu0.b32.cont [9/16] 0.0, 128
        %251 = vxpose.xlu0.b32.cont [10/16] 0.0, 128
        %252 = vxpose.xlu0.b32.cont [11/16] 0.0, 128
        %253 = vxpose.xlu0.b32.cont [12/16] 0.0, 128
        %254 = vxpose.xlu0.b32.cont [13/16] 0.0, 128
        %255 = vxpose.xlu0.b32.cont [14/16] 0.0, 128
        %256 = vxpose.xlu0.b32.cont [15/16] 0.0, 128
        %257 = vxpose.xlu0.b32.end [16/16] 0.0, 128
        %v258 = vpop.trf.xlu0
        %v259 = vpop.trf.xlu0
        %v260 = vpop.trf.xlu0
        %v261 = vpop.trf.xlu0
        %v262 = vpop.trf.xlu0
        %v263 = vpop.trf.xlu0
        %v264 = vpop.trf.xlu0
        %v265 = vpop.trf.xlu0
        %v266 = vpop.trf.xlu0
        %v267 = vpop.trf.xlu0
        %v268 = vpop.trf.xlu0
        %v269 = vpop.trf.xlu0
        %v270 = vpop.trf.xlu0
        %v271 = vpop.trf.xlu0
        %v272 = vpop.trf.xlu0
        %v273 = vpop.trf.xlu0
        %vm274 = vcmask 130048
        %275 = vst.msk [vmem:[%s135] sm:$0xff] %vm274, %v162
        %276 = vst.msk [vmem:[%s135 + $0x8] sm:$0xff] %vm274, %v163
        %277 = vst.msk [vmem:[%s135 + $0x10] sm:$0xff] %vm274, %v194
        %278 = vst.msk [vmem:[%s135 + $0x18] sm:$0xff] %vm274, %v195
        %279 = vst.msk [vmem:[%s135 + $0x20] sm:$0xff] %vm274, %v226
        %280 = vst.msk [vmem:[%s135 + $0x28] sm:$0xff] %vm274, %v227
        %281 = vst.msk [vmem:[%s135 + $0x30] sm:$0xff] %vm274, %v258
        %282 = vst.msk [vmem:[%s135 + $0x38] sm:$0xff] %vm274, %v259
        %s283 = sand.u32 %s52, 1
        %s284 = scalar_lea.sflag [#allocation4], %s283
        %s285 = sand.u32 %s52, 1
        %s286 = smul.addr %s285, 64
        %s287 = scalar_lea.vmem [#allocation5], %s286
        // Predicated region
        $region29: #{tpu_custom_call.1} parent=23 // pred_check
          %p288 = pneg %p62
        $region30: #{tpu_custom_call.1} parent=23 // pred_check_branch
          %290 = sbr.rel (%p288) target = $region32
        $region31: #{tpu_custom_call.1} parent=23 // pred_region
          %s291 = smul.u32 4, %s18
          %s293 = ssub.s32 1024, 1024
          %294 = vsyncadd %s284, %s293
          %s295 = smul.addr %s291, 2
          %s296 = smul.addr %s295, 128
          %s297 = scalar_lea.hbm %s1, %s296
          %s298 = sshll.u32 %s287, 4
          %s299 = int_to_ptr.vmem [resolvable:$true] %s298
          %304 = dma.vmem_to_hbm [thread:$0]  %s299, 1024, %s297, %s284, 128, 128, 8
        $region32: #{tpu_custom_call.1} parent=23 // pred_fallthru
          _
      $region24: #{tpu_custom_call.1} parent=5 // pred_fallthru
        _
      %p305 = scmp.le.s32.totalorder 2, %s13
      // Predicated region
      $region33: #{tpu_custom_call.1} parent=5 // pred_check
        %p306 = pneg %p305
      $region34: #{tpu_custom_call.1} parent=5 // pred_check_branch
        %308 = sbr.rel (%p306) target = $region36
      $region35: #{tpu_custom_call.1} parent=5 // pred_region
        %s309 = ssub.s32 %s13, 2
        // Predicated region
        $region37: #{tpu_custom_call.1} parent=35 // pred_check
          %p310 = pneg %p68
        $region38: #{tpu_custom_call.1} parent=35 // pred_check_branch
          %312 = sbr.rel (%p310) target = $region40
        $region39: #{tpu_custom_call.1} parent=35 // pred_region
          %s313 = sand.u32 %s53, 1
          %s314 = scalar_lea.sflag [#allocation4], %s313
          %s315 = sand.u32 %s53, 1
          %s316 = smul.addr %s315, 64
          %s317 = scalar_lea.vmem [#allocation5], %s316
          %318 = dma.done %s314, 1024
        $region40: #{tpu_custom_call.1} parent=35 // pred_fallthru
          _
      $region36: #{tpu_custom_call.1} parent=5 // pred_fallthru
        _
    $region6: #{tpu_custom_call.1} parent=1 // loop_footer
      %s17 = sadd.s32 1, %s13
    $region7: #{tpu_custom_call.1} parent=1 // loop_footer_branch
      %12 = sbr.rel target = $region3
    $region8: #{tpu_custom_call.1} parent=1 // loop_exit
      _
    %319 = vsyncpa [#allocation3], 1
    %s320 = scalar_lea.sflag [#allocation3], 1
    %321 = vsyncpa %s320, 1
    %322 = vsyncpa [#allocation4], 1
    %s323 = scalar_lea.sflag [#allocation4], 1
    %324 = vsyncpa %s323, 1

</llo_original>
